<compile_context>
chip_gen: v7x
topology: tpu7x:2x2x1
jax: 0.10.0
libtpu: 0.0.40
codegen_flags: <defaults>
</compile_context>

<pallas_src>
import jax
import jax.numpy as jnp
from jax.experimental import pallas as pl
from jax.experimental.pallas import tpu as pltpu


# ---------------------------------------------------------------------------
# small helpers
# ---------------------------------------------------------------------------
def _round_up(x, m):
    return ((x + m - 1) // m) * m


def _pick_tile(dim, candidates):
    for c in candidates:
        if dim >= c and dim % c == 0:
            return c
    return dim  # full-extent fallback (always legal); callers pre-pad M/N when it matters


def _vmem_cap_bytes():
    try:
        return int(pltpu.get_tpu_info().vmem_capacity_bytes)
    except Exception:
        return 64 * 1024 * 1024          # v7x-safe assumption (64 MiB per TensorCore)


def _vmem_limit(needed_bytes):
    cap = _vmem_cap_bytes()
    return int(max(32 * 1024 * 1024, min(int(needed_bytes), int(cap * 0.85))))


# ---------------------------------------------------------------------------
# tiled bias-free Linear:  y = x @ W   (x cast to bf16 in-kernel, f32 accumulate)
# ---------------------------------------------------------------------------
def _matmul_kernel(x_ref, w_ref, o_ref, acc_ref):
    @pl.when(pl.program_id(2) == 0)
    def _init():
        acc_ref[...] = jnp.zeros_like(acc_ref)

    acc_ref[...] += jnp.dot(x_ref[...].astype(jnp.bfloat16), w_ref[...],
                            preferred_element_type=jnp.float32)

    @pl.when(pl.program_id(2) == pl.num_programs(2) - 1)
    def _store():
        o_ref[...] = acc_ref[...].astype(o_ref.dtype)


def linear_nobias(x, w, out_dtype=jnp.bfloat16):
    """x: (..., K) @ w: (K, N) bf16 -> (..., N) out_dtype, tiled & pipelined."""
    lead = x.shape[:-1]
    K = x.shape[-1]
    N = w.shape[1]
    x2 = x.reshape(-1, K)
    M = x2.shape[0]
    Mp = _round_up(M, 8)
    Np = N if N % 128 == 0 else _round_up(N, 128)   # lane-dense (unmasked) stores
    if Mp != M:
        x2 = jnp.pad(x2, ((0, Mp - M), (0, 0)))
    wb = w.astype(jnp.bfloat16)
    if Np != N:
        wb = jnp.pad(wb, ((0, 0), (0, Np - N)))
    tm = _pick_tile(Mp, (512, 256, 128, 64, 32, 16, 8))
    tn = _pick_tile(Np, (512, 256, 128))
    tk = _pick_tile(K, (512, 256, 128))             # non-dividing K falls back to full extent
    out = pl.pallas_call(
        _matmul_kernel,
        out_shape=jax.ShapeDtypeStruct((Mp, Np), out_dtype),
        grid=(Mp // tm, Np // tn, K // tk),
        in_specs=[pl.BlockSpec((tm, tk), lambda i, j, k: (i, k)),
                  pl.BlockSpec((tk, tn), lambda i, j, k: (k, j))],
        out_specs=pl.BlockSpec((tm, tn), lambda i, j, k: (i, j)),
        scratch_shapes=[pltpu.VMEM((tm, tn), jnp.float32)],
        compiler_params=pltpu.CompilerParams(
            dimension_semantics=("parallel", "parallel", "arbitrary")),
    )(x2, wb)
    if Mp != M or Np != N:
        out = out[:M, :N]
    return out.reshape(*lead, N)


# ---------------------------------------------------------------------------
# fused transformer layer kernel (banded local attention + SwiGLU FF)
# ---------------------------------------------------------------------------
def _make_layer_kernel(*, n_heads, dim_head, window, seq_len, tq, hl, pad,
                       manual_dma, eps=1e-5):
    D = n_heads * dim_head
    scale = dim_head ** -0.5
    w_half = window // 2
    n_tiles = seq_len // tq

    def _layer_norm(v, gamma):          # F.layer_norm(..., weight=gamma, bias=None)
        mu = jnp.mean(v, axis=-1, keepdims=True)
        var = jnp.mean(jnp.square(v - mu), axis=-1, keepdims=True)
        return (v - mu) * jax.lax.rsqrt(var + eps) * gamma

    def _compute(x_all, xq_raw, q0, kstart, refs, o_ref):
        (g1_ref, g2_ref, invf_ref,
         wq_ref, wqr_ref, wk_ref, wkr_ref, wv_ref, wo_ref,
         wffa_ref, wffg_ref, wffo_ref) = refs
        g1 = g1_ref[...]
        g2 = g2_ref[...]
        invf = invf_ref[...]                              # (1, dh) interleaved freqs, 0 tail

        # ---- attention norm (K/V slab + query rows) ----
        xn_all = _layer_norm(x_all, g1).astype(jnp.bfloat16)   # (hl, D)
        xn_q = _layer_norm(xq_raw, g1).astype(jnp.bfloat16)    # (tq, D)

        # ---- RoPE cos/sin: computed at head width once, tiled across heads; q-scale folded
        q_pos = (q0 + jax.lax.broadcasted_iota(jnp.int32, (tq, 1), 0)).astype(jnp.float32)
        k_pos = (kstart + jax.lax.broadcasted_iota(jnp.int32, (hl, 1), 0)).astype(jnp.float32)
        ang_q = q_pos * invf                               # (tq, dh)
        ang_k = k_pos * invf                               # (hl, dh)
        cos_q = jnp.tile(jnp.cos(ang_q) * scale, (1, n_heads))
        sin_q = jnp.tile(jnp.sin(ang_q) * scale, (1, n_heads))
        cos_k = jnp.tile(jnp.cos(ang_k), (1, n_heads))
        sin_k = jnp.tile(jnp.sin(ang_k), (1, n_heads))

        # ---- fused all-head Q/K/V projections; rotate-half folded into wq_rot/wk_rot ----
        q = jnp.dot(xn_q, wq_ref[...], preferred_element_type=jnp.float32)
        q_rot = jnp.dot(xn_q, wqr_ref[...], preferred_element_type=jnp.float32)
        k = jnp.dot(xn_all, wk_ref[...], preferred_element_type=jnp.float32)
        k_rot = jnp.dot(xn_all, wkr_ref[...], preferred_element_type=jnp.float32)
        v = jnp.dot(xn_all, wv_ref[...], preferred_element_type=jnp.float32)
        q_b = (q * cos_q + q_rot * sin_q).astype(jnp.bfloat16)     # (tq, D), pre-scaled
        k_b = (k * cos_k + k_rot * sin_k).astype(jnp.bfloat16)     # (hl, D)
        v_b = v.astype(jnp.bfloat16)

        # ---- NATTEN-1D (dilation=1) neighborhood mask, absolute coordinates ----
        # query i attends to [clamp(i - w//2, 0, N - w), +window)
        i_col = q0 + jax.lax.broadcasted_iota(jnp.int32, (tq, 1), 0)
        j_row = kstart + jax.lax.broadcasted_iota(jnp.int32, (1, hl), 1)
        nb_start = jnp.clip(i_col - w_half, 0, seq_len - window)
        allowed = (j_row >= nb_start) & (j_row < nb_start + window)     # (tq, hl)

        # ---- per-head banded attention (scores/PV stay per-head, dh wide) ----
        # TODO(synk): natten1dqk q/k scaling is natten-version dependent; standard
        # 1/sqrt(dim_head) scaling is used here.
        # TODO(synk): for windows << 128 most of the (tq, hl) score block is masked; a
        # gather into (tq, round_up(window,128)) blocks would remove that MXU/EUP waste.
        heads_out = []
        for h in range(n_heads):
            sl = slice(h * dim_head, (h + 1) * dim_head)
            s = jax.lax.dot_general(q_b[:, sl], k_b[:, sl],
                                    (((1,), (1,)), ((), ())),
                                    preferred_element_type=jnp.float32)   # (tq, hl)
            s = jnp.where(allowed, s, -1e30)
            s = s - jnp.max(s, axis=-1, keepdims=True)
            p = jnp.exp(s)
            p = p * pl.reciprocal(jnp.sum(p, axis=-1, keepdims=True))     # exact
            heads_out.append(jnp.dot(p.astype(jnp.bfloat16), v_b[:, sl],
                                     preferred_element_type=jnp.float32))
        attn = jnp.concatenate(heads_out, axis=-1).astype(jnp.bfloat16)   # (tq, D)

        # ---- single full-width output projection + residual ----
        x1 = jnp.dot(attn, wo_ref[...], preferred_element_type=jnp.float32) + xq_raw

        # ---- SwiGLU feed-forward (GLU value/gate as two full-width matmuls, no bias) ----
        x1_nb = _layer_norm(x1, g2).astype(jnp.bfloat16)
        a = jnp.dot(x1_nb, wffa_ref[...], preferred_element_type=jnp.float32)
        g = jnp.dot(x1_nb, wffg_ref[...], preferred_element_type=jnp.float32)
        ff = a * (g * jax.nn.sigmoid(g))                  # value * SiLU(gate)
        x2 = jnp.dot(ff.astype(jnp.bfloat16), wffo_ref[...],
                     preferred_element_type=jnp.float32) + x1
        o_ref[...] = x2.astype(o_ref.dtype)

    if not manual_dma:
        # ---- regime 1: whole sequence is one resident BlockSpec block per batch row ----
        def kernel(x_ref, g1_ref, g2_ref, invf_ref,
                   wq_ref, wqr_ref, wk_ref, wkr_ref, wv_ref, wo_ref,
                   wffa_ref, wffg_ref, wffo_ref, o_ref):
            t = pl.program_id(1)
            q0 = t * tq
            qoff = pl.multiple_of(q0, 8)
            x_all = x_ref[...].astype(jnp.float32)                      # (N, D)
            xq_raw = x_ref[pl.ds(qoff, tq), :].astype(jnp.float32)      # (tq, D)
            refs = (g1_ref, g2_ref, invf_ref, wq_ref, wqr_ref, wk_ref, wkr_ref,
                    wv_ref, wo_ref, wffa_ref, wffg_ref, wffo_ref)
            _compute(x_all, xq_raw, q0, 0, refs, o_ref)
        return kernel

    # ---- regime 2: banded K/V slab, manual HBM DMA with one-tile-ahead prefetch ----
    def kernel(x_hbm_ref, g1_ref, g2_ref, invf_ref,
               wq_ref, wqr_ref, wk_ref, wkr_ref, wv_ref, wo_ref,
               wffa_ref, wffg_ref, wffo_ref, o_ref, kbuf_ref, sem_ref):
        b = pl.program_id(0)
        t = pl.program_id(1)
        q0 = t * tq

        def kstart_of(tt):
            return jnp.clip(tt * tq - pad, 0, seq_len - hl)   # 8-aligned by construction

        def start_fetch(tt, slot):
            pltpu.make_async_copy(
                x_hbm_ref.at[b, pl.ds(kstart_of(tt), hl), :],
                kbuf_ref.at[slot], sem_ref.at[slot]).start()

        # tile 0 of each batch row is not covered by the prefetch chain (exposed once per b)
        @pl.when(t == 0)
        def _():
            start_fetch(0, 0)

        # prefetch the next tile's slab (same batch row), overlapping this tile's compute;
        # the chain stays inside one core because only the batch axis is megacore-parallel.
        @pl.when(t + 1 < n_tiles)
        def _():
            start_fetch(t + 1, (t + 1) % 2)

        slot = t % 2
        kstart = kstart_of(t)
        pltpu.make_async_copy(
            x_hbm_ref.at[b, pl.ds(kstart, hl), :],
            kbuf_ref.at[slot], sem_ref.at[slot]).wait()

        qoff = pl.multiple_of(q0 - kstart, 8)
        slab = kbuf_ref.at[slot]
        x_all = slab[...].astype(jnp.float32)                           # (hl, D)
        xq_raw = slab[pl.ds(qoff, tq), :].astype(jnp.float32)           # (tq, D)
        refs = (g1_ref, g2_ref, invf_ref, wq_ref, wqr_ref, wk_ref, wkr_ref,
                wv_ref, wo_ref, wffa_ref, wffg_ref, wffo_ref)
        _compute(x_all, xq_raw, q0, kstart, refs, o_ref)

    return kernel


def transformer_layer(x, lp, n_heads, window, inv_freq, *, tq_target=None):
    B, N, D = x.shape
    dim_head = D // n_heads
    inner = lp['w_ff_a'].shape[1]
    assert n_heads * dim_head == D
    assert window <= N, "local_attn_window_size must be <= sequence length"

    if tq_target is None:
        # v5e/v6e (128 MiB VMEM) afford a larger query tile than v7x (64 MiB / TC)
        tq_target = 512 if _vmem_cap_bytes() >= (96 << 20) else 256

    # query tile + 8-aligned halo so the score block is (tq, tq + 2*pad), not (N, N)
    tq = _pick_tile(N, (tq_target, 256, 128, 64, 32, 16, 8))
    pad = _round_up(window // 2, 8)
    hl = min(N, tq + 2 * pad)
    manual_dma = hl < N
    n_tiles = N // tq

    kernel = _make_layer_kernel(
        n_heads=n_heads, dim_head=dim_head, window=window,
        seq_len=N, tq=tq, hl=hl, pad=pad, manual_dma=manual_dma)

    weights = [lp['g_attn'], lp['g_ff'], inv_freq,
               lp['wq'], lp['wq_rot'], lp['wk'], lp['wk_rot'], lp['wv'], lp['wo'],
               lp['w_ff_a'], lp['w_ff_g'], lp['w_ff_out']]
    weight_bytes = sum(int(w.size) * w.dtype.itemsize for w in weights)
    # resident weights (constant index maps): single-buffer once they are big enough to
    # matter so double-buffering cannot blow v7x's 64 MiB VMEM at realistic D.
    single_buffer = weight_bytes > (4 << 20)

    def wspec(shape):
        if single_buffer:
            return pl.BlockSpec(shape, lambda b, t: (0,) * len(shape),
                                pipeline_mode=pl.Buffered(1))
        return pl.BlockSpec(shape, lambda b, t: (0,) * len(shape))

    w_specs = [wspec((1, D)), wspec((1, D)), wspec((1, dim_head)),
               wspec((D, D)), wspec((D, D)), wspec((D, D)), wspec((D, D)),
               wspec((D, D)), wspec((D, D)),
               wspec((D, inner)), wspec((D, inner)), wspec((inner, D))]
    out_spec = pl.BlockSpec((None, tq, D), lambda b, t: (b, t, 0))

    itemsize = jnp.dtype(x.dtype).itemsize
    io_bytes = 2 * tq * D * itemsize                       # pipelined output tile
    io_bytes += (2 * hl if manual_dma else 2 * N) * D * itemsize
    interm = tq * (2 * inner + 8 * D) * 4 + 2 * n_heads * tq * hl * 4
    limit = _vmem_limit((1 if single_buffer else 2) * weight_bytes
                        + io_bytes + interm + (8 << 20))

    if manual_dma:
        in_specs = [pl.BlockSpec(memory_space=pl.ANY)] + w_specs
        scratch = [pltpu.VMEM((2, hl, D), x.dtype),        # double-buffered K/V slab
                   pltpu.SemaphoreType.DMA((2,))]
        dims = ("parallel", "arbitrary")                   # prefetch chain runs along t
    else:
        in_specs = [pl.BlockSpec((None, N, D), lambda b, t: (b, 0, 0))] + w_specs
        scratch = []
        dims = ("parallel", "parallel")

    return pl.pallas_call(
        kernel,
        out_shape=jax.ShapeDtypeStruct((B, N, D), x.dtype),
        grid=(B, n_tiles),
        in_specs=in_specs,
        out_specs=out_spec,
        scratch_shapes=scratch,
        compiler_params=pltpu.CompilerParams(
            dimension_semantics=dims,
            vmem_limit_bytes=limit),
    )(x, *weights)


# ---------------------------------------------------------------------------
# RoPE constants (rotary-embedding-torch: interleaved pairs, partial rotation)
# ---------------------------------------------------------------------------
def rope_inv_freq(dim_head):
    rot_dim = max(dim_head // 2, 32)
    assert rot_dim % 2 == 0 and rot_dim <= dim_head
    inv = 1.0 / (10000.0 ** (jnp.arange(0, rot_dim, 2, dtype=jnp.float32) / rot_dim))
    inv = jnp.repeat(inv, 2)                       # (f0,f0,f1,f1,...) interleaved
    inv = jnp.pad(inv, (0, dim_head - rot_dim))    # unrotated tail -> freq 0 (cos=1, sin=0)
    return inv.reshape(1, dim_head)


def _rotate_half_columns(w):
    """Return w @ R with R the interleaved pair-swap ((x0,x1)->(-x1,x0)), so that
    x @ (w @ R) == rotate_half(x @ w) in the rotary-embedding-torch convention."""
    cols = w.shape[1]
    assert cols % 2 == 0
    j = jnp.arange(cols)
    perm = j + jnp.where(j % 2 == 0, 1, -1)
    sign = jnp.where(j % 2 == 0, -1.0, 1.0).astype(jnp.float32)
    return (w[:, perm].astype(jnp.float32) * sign).astype(w.dtype)


def _permute_upsample_columns(w, dim, ratio):
    """Permute project_up columns so 'b n (c r) -> b (n r) c' becomes a free reshape."""
    j = jnp.arange(dim * ratio)
    old = (j % dim) * ratio + (j // dim)
    return w[:, old]


# ---------------------------------------------------------------------------
# parameters (deterministic; shapes follow the module's __init__; weights in bf16)
# ---------------------------------------------------------------------------
def _winit(key, shape, scale=0.05):
    return (scale * jax.random.normal(key, shape, dtype=jnp.float32)).astype(jnp.bfloat16)


def init_layer(key, dim, n_heads, ff_mult=2):
    inner = dim * ff_mult
    ks = jax.random.split(key, 7)
    wq = _winit(ks[0], (dim, dim))                 # fused all-head projection (D, H*dh)
    wk = _winit(ks[1], (dim, dim))
    return dict(
        g_attn=jnp.ones((1, dim), jnp.float32),
        g_ff=jnp.ones((1, dim), jnp.float32),
        wq=wq, wq_rot=_rotate_half_columns(wq),    # RoPE rotate-half folded into weights
        wk=wk, wk_rot=_rotate_half_columns(wk),
        wv=_winit(ks[2], (dim, dim)),
        wo=_winit(ks[3], (dim, dim)),              # reference zero-inits; randomized here
        w_ff_a=_winit(ks[4], (dim, inner)),        # GLU Linear(dim, 2*inner, bias=False) split
        w_ff_g=_winit(ks[5], (dim, inner)),
        w_ff_out=_winit(ks[6], (inner, dim)),      # no_bias; reference zero-inits
    )


def init_decoder(key, in_channels, out_channels, embed_dims, heads, depths, ratios,
                 local_attn_window_size):
    keys = jax.random.split(key, 2 + len(embed_dims))
    params = dict(
        project_in=_winit(keys[0], (in_channels, embed_dims[0])),
        project_out=_winit(keys[1], (embed_dims[-1], out_channels)),
        blocks=[],
    )
    for layer in range(len(embed_dims)):
        prev_dim = embed_dims[layer - 1] if layer > 0 else embed_dims[0]
        dim = embed_dims[layer]
        bkeys = jax.random.split(keys[2 + layer], 2 + depths[layer])
        params['blocks'].append(dict(
            ratio=ratios[layer],
            heads=heads[layer],
            window=local_attn_window_size,
            project_in=None if prev_dim == dim else _winit(bkeys[0], (prev_dim, dim)),
            project_up=_permute_upsample_columns(
                _winit(bkeys[1], (dim, dim * ratios[layer])), dim, ratios[layer]),
            layers=[init_layer(bkeys[2 + d], dim, heads[layer])
                    for d in range(depths[layer])],
        ))
    return params


# ---------------------------------------------------------------------------
# forward pass
# ---------------------------------------------------------------------------
def transformer_decoder_1d(x_bcn, params, *, tq_target=None):
    x = jnp.transpose(x_bcn, (0, 2, 1))                    # b c n -> b n c
    x = linear_nobias(x, params['project_in'])             # bf16 activations between kernels
    for block in params['blocks']:
        if block['project_in'] is not None:
            x = linear_nobias(x, block['project_in'])
        x = linear_nobias(x, block['project_up'])          # columns pre-permuted at init
        B, N, CR = x.shape
        r = block['ratio']
        C = CR // r
        x = x.reshape(B, N * r, C)                         # 'b n (c r) -> b (n r) c', free now
        dim_head = C // block['heads']
        inv_freq = rope_inv_freq(dim_head)
        for lp in block['layers']:                         # ContinuousLocalTransformer layers
            x = transformer_layer(x, lp, block['heads'], block['window'], inv_freq,
                                  tq_target=tq_target)
    x = linear_nobias(x, params['project_out'], out_dtype=jnp.float32)
    return jnp.transpose(x, (0, 2, 1))                     # b n c -> b c n


if __name__ == "__main__":
    key = jax.random.PRNGKey(0)
    pkey, xkey = jax.random.split(key)

    # small synthetic config (dim_head = 64 in both blocks so partial RoPE is well-defined)
    in_channels, out_channels = 8, 4
    embed_dims = [128, 64]
    heads = [2, 1]
    depths = [1, 1]
    ratios = [2, 2]
    window = 7                    # local_attn_window_size (odd, <= every transformer seq len)

    params = init_decoder(pkey, in_channels, out_channels, embed_dims, heads, depths,
                          ratios, local_attn_window_size=window)

    B, N0 = 2, 32
    x = jax.random.normal(xkey, (B, in_channels, N0), dtype=jnp.float32)   # [B, C, N]

    # run 1: default query tile -> whole sequence fits the slab (resident-block regime)
    y1 = transformer_decoder_1d(x, params)
    jax.block_until_ready(y1)
    # run 2: small query tile -> banded slab with manual halo DMA + prefetch (manual regime)
    y2 = transformer_decoder_1d(x, params, tq_target=32)
    jax.block_until_ready(y2)

    assert y1.shape == (B, out_channels, N0 * ratios[0] * ratios[1]), y1.shape
    assert bool(jnp.all(jnp.isfinite(y1))) and bool(jnp.all(jnp.isfinite(y2)))
    # both tilings implement the same masked local attention; they must agree
    assert bool(jnp.allclose(y1, y2, atol=1e-2, rtol=1e-2)), \
        float(jnp.max(jnp.abs(y1 - y2)))
    print("KERNEL_OK")
</pallas_src>

<mosaic_0001>
module attributes {stable_mosaic.version = 11 : i64} {
  func.func @_matmul_kernel(%arg0: i32, %arg1: i32, %arg2: i32, %arg3: memref<64x8xf32, #tpu.memory_space<vmem>>, %arg4: memref<8x128xbf16, #tpu.memory_space<vmem>>, %arg5: memref<64x128xbf16, #tpu.memory_space<vmem>>, %arg6: memref<64x128xf32, #tpu.memory_space<vmem>>) attributes {dimension_semantics = [#tpu.dimension_semantics<parallel>, #tpu.dimension_semantics<parallel>, #tpu.dimension_semantics<arbitrary>], iteration_bounds = array<i64: 1, 1, 1>, scalar_prefetch = 0 : i64, scratch_operands = 1 : i64, tpu.core_type = #tpu.core_type<tc>, window_params = [{transform_indices = @transform_0, window_bounds = array<i64: 64, 8>}, {transform_indices = @transform_1, window_bounds = array<i64: 8, 128>}, {transform_indices = @transform_2, window_bounds = array<i64: 64, 128>}]} {
    %c0_i32 = arith.constant 0 : i32
    %0 = arith.cmpi eq, %arg2, %c0_i32 : i32
    %1 = arith.extui %0 : i1 to i32
    %c0_i32_0 = arith.constant 0 : i32
    %2 = arith.cmpi ne, %1, %c0_i32_0 : i32
    scf.if %2 {
      %cst_10 = arith.constant 0.000000e+00 : f32
      %13 = vector.broadcast %cst_10 : f32 to vector<64x128xf32>
      %c0_11 = arith.constant 0 : index
      %c0_12 = arith.constant 0 : index
      %14 = vector.load %arg6[%c0_11, %c0_12] : memref<64x128xf32, #tpu.memory_space<vmem>>, vector<64x128xf32>
      tpu.vector_store %arg6[%c0_11, %c0_12], %13 {strides = array<i32>} : memref<64x128xf32, #tpu.memory_space<vmem>>, vector<64x128xf32>,
    } else {
    }
    %c0 = arith.constant 0 : index
    %c0_1 = arith.constant 0 : index
    %3 = vector.load %arg6[%c0, %c0_1] : memref<64x128xf32, #tpu.memory_space<vmem>>, vector<64x128xf32>
    %c0_2 = arith.constant 0 : index
    %c0_3 = arith.constant 0 : index
    %4 = vector.load %arg3[%c0_2, %c0_3] : memref<64x8xf32, #tpu.memory_space<vmem>>, vector<64x8xf32>
    %5 = arith.truncf %4 : vector<64x8xf32> to vector<64x8xbf16>
    %c0_4 = arith.constant 0 : index
    %c0_5 = arith.constant 0 : index
    %6 = vector.load %arg4[%c0_4, %c0_5] : memref<8x128xbf16, #tpu.memory_space<vmem>>, vector<8x128xbf16>
    %cst = arith.constant dense<0.000000e+00> : vector<64x128xf32>
    %7 = tpu.matmul %5, %6, %cst {dimension_numbers = #tpu.dot_dimension_numbers<[1], [0], [0], [1], [0, 0, 1, 1], [], []>} : vector<64x8xbf16>, vector<8x128xbf16>, vector<64x128xf32> -> vector<64x128xf32>
    %8 = arith.addf %3, %7 : vector<64x128xf32>
    %c0_6 = arith.constant 0 : index
    %c0_7 = arith.constant 0 : index
    %9 = vector.load %arg6[%c0_6, %c0_7] : memref<64x128xf32, #tpu.memory_space<vmem>>, vector<64x128xf32>
    tpu.vector_store %arg6[%c0_6, %c0_7], %8 {strides = array<i32>} : memref<64x128xf32, #tpu.memory_space<vmem>>, vector<64x128xf32>,
    %c0_i32_8 = arith.constant 0 : i32
    %10 = arith.cmpi eq, %arg2, %c0_i32_8 : i32
    %11 = arith.extui %10 : i1 to i32
    %c0_i32_9 = arith.constant 0 : i32
    %12 = arith.cmpi ne, %11, %c0_i32_9 : i32
    scf.if %12 {
      %c0_10 = arith.constant 0 : index
      %c0_11 = arith.constant 0 : index
      %13 = vector.load %arg6[%c0_10, %c0_11] : memref<64x128xf32, #tpu.memory_space<vmem>>, vector<64x128xf32>
      %14 = arith.truncf %13 : vector<64x128xf32> to vector<64x128xbf16>
      %c0_12 = arith.constant 0 : index
      %c0_13 = arith.constant 0 : index
      %15 = vector.load %arg5[%c0_12, %c0_13] : memref<64x128xbf16, #tpu.memory_space<vmem>>, vector<64x128xbf16>
      tpu.vector_store %arg5[%c0_12, %c0_13], %14 {strides = array<i32>} : memref<64x128xbf16, #tpu.memory_space<vmem>>, vector<64x128xbf16>,
    } else {
    }
    return
  }
  func.func @transform_0(%arg0: i32, %arg1: i32, %arg2: i32) -> (i32, i32) {
    %c0_i32 = arith.constant 0 : i32
    return %arg0, %arg2 : i32, i32
  }
  func.func @transform_1(%arg0: i32, %arg1: i32, %arg2: i32) -> (i32, i32) {
    %c0_i32 = arith.constant 0 : i32
    return %arg2, %arg1 : i32, i32
  }
  func.func @transform_2(%arg0: i32, %arg1: i32, %arg2: i32) -> (i32, i32) {
    %c0_i32 = arith.constant 0 : i32
    return %arg0, %arg1 : i32, i32
  }
}

</mosaic_0001>

<llo_original>
// kernel: tpu_custom_call.1
$region0: #{tpu_custom_call.1}
  #allocation0 [shape = 'u32[]', space=smem, size = 0x4, offset = 0x4, fixed_abs, tag = 'smem constant byte address 0x4 - core index']
  #allocation1 [shape = 'u32[144,128]{1,0:T(1,128)}', space=vmem, size = 0x12000, scoped, tag = 'internal scratch']
  #allocation2 [shape = 'f32[64,128]{1,0:T(8,128)}', space=vmem, size = 0x8000, scoped, tag = 'scratch operand']
  %s0 = inlined_call_operand.vmem [shape: f32[64,8], index: 0, kind: input, shape index: {}]
  %s1 = inlined_call_operand.vmem [shape: bf16[8,128], index: 1, kind: input, shape index: {}]
  %s2 = inlined_call_operand.hbm [shape: bf16[64,128], index: 2, kind: output, shape index: {}]
  %s3 = sld [smem:[#allocation0]]
  $region26: #{tpu_custom_call.1} parent=0
    _
  %s5 = ssub.s32 1, %s3
  %s6 = scalar_select 0, %s5, %s3
  $region1: #{tpu_custom_call.1} parent=0
    #allocation3 [shape = 'u8[16384]{0}', space=vmem, size = 0x4000, scoped, tag = 'output window, operand 0, single buffered']
    #allocation4 [shape = 's32[1]{0}', space=sflag, size = 0x4, scoped, tag = 'scoped memory for tpu_custom_call.1']
    %7 = vsyncpa [#allocation4], 0
    // Predicated region
    $region2: #{tpu_custom_call.1} parent=1 // pred_check
      _
    $region3: #{tpu_custom_call.1} parent=1 // pred_check_branch
      %9 = sbr.rel (0) target = $region5
    $region4: #{tpu_custom_call.1} parent=1 // pred_region
      _
    $region5: #{tpu_custom_call.1} parent=1 // pred_fallthru
      _
    // Predicated region
    $region6: #{tpu_custom_call.1} parent=1 // pred_check
      _
    $region7: #{tpu_custom_call.1} parent=1 // pred_check_branch
      %11 = sbr.rel (0) target = $region9
    $region8: #{tpu_custom_call.1} parent=1 // pred_region
      _
    $region9: #{tpu_custom_call.1} parent=1 // pred_fallthru
      _
    %p13 = scmp.eq.s32.totalorder 0, 0
    // Predicated region
    $region10: #{tpu_custom_call.1} parent=1 // pred_check
      %p14 = pneg %p13
    $region11: #{tpu_custom_call.1} parent=1 // pred_check_branch
      %16 = sbr.rel (%p14) target = $region13
    $region12: #{tpu_custom_call.1} parent=1 // pred_region
      %17 = vst [vmem:[#allocation2] sm:$0xff] 0.0
      %18 = vst [vmem:[#allocation2 + $0x8] sm:$0xff] 0.0
      %19 = vst [vmem:[#allocation2 + $0x10] sm:$0xff] 0.0
      %20 = vst [vmem:[#allocation2 + $0x18] sm:$0xff] 0.0
      %21 = vst [vmem:[#allocation2 + $0x20] sm:$0xff] 0.0
      %22 = vst [vmem:[#allocation2 + $0x28] sm:$0xff] 0.0
      %23 = vst [vmem:[#allocation2 + $0x30] sm:$0xff] 0.0
      %24 = vst [vmem:[#allocation2 + $0x38] sm:$0xff] 0.0
    $region13: #{tpu_custom_call.1} parent=1 // pred_fallthru
      _
    %v25 = vld [vmem:[#allocation2] sm:$0xff]
    %v26 = vld [vmem:[#allocation2 + $0x8] sm:$0xff]
    %v27 = vld [vmem:[#allocation2 + $0x10] sm:$0xff]
    %v28 = vld [vmem:[#allocation2 + $0x18] sm:$0xff]
    %v29 = vld [vmem:[#allocation2 + $0x20] sm:$0xff]
    %v30 = vld [vmem:[#allocation2 + $0x28] sm:$0xff]
    %v31 = vld [vmem:[#allocation2 + $0x30] sm:$0xff]
    %v32 = vld [vmem:[#allocation2 + $0x38] sm:$0xff]
    %v33 = vld [vmem:[%s0] sm:$0xff]
    %v34 = vld [vmem:[%s0 + $0x8] sm:$0xff]
    %v35 = vld [vmem:[%s0 + $0x10] sm:$0xff]
    %v36 = vld [vmem:[%s0 + $0x18] sm:$0xff]
    %v37 = vld [vmem:[%s0 + $0x20] sm:$0xff]
    %v38 = vld [vmem:[%s0 + $0x28] sm:$0xff]
    %v39 = vld [vmem:[%s0 + $0x30] sm:$0xff]
    %v40 = vld [vmem:[%s0 + $0x38] sm:$0xff]
    %v41 = vpack.c.bf16 %v34, %v33
    %v42 = vpack.c.bf16 %v36, %v35
    %v43 = vpack.c.bf16 %v38, %v37
    %v44 = vpack.c.bf16 %v40, %v39
    %v45 = vld [vmem:[%s1] sm:$0xf]
    %vm46 = vcmask 64512
    %v48 = vsel %vm46, %v41, 0
    %v51 = vsel %vm46, %v42, 0
    %v54 = vsel %vm46, %v43, 0
    %v57 = vsel %vm46, %v44, 0
    %vm59 = vcmask 1043456
    %v61 = vsel %vm59, %v45, 0
    %63 = vmatprep.subr.bf16.mxu0 0
    %64 = vmatpush1.bf16.msra.mxu0 %v61
    %65 = vmatprep.subr.bf16.mxu0 0
    %66 = vmatpush1.bf16.msra.mxu0 0
    %67 = vmatprep.subr.bf16.mxu0 0
    %68 = vmatpush1.bf16.msra.mxu0 0
    %69 = vmatprep.subr.bf16.mxu0 0
    %70 = vmatpush1.bf16.msra.mxu0 0
    %71 = vmatprep.subr.bf16.mxu0 0
    %72 = vmatpush1.bf16.msra.mxu0 0
    %73 = vmatprep.subr.bf16.mxu0 0
    %74 = vmatpush1.bf16.msra.mxu0 0
    %75 = vmatprep.subr.bf16.mxu0 0
    %76 = vmatpush1.bf16.msra.mxu0 0
    %77 = vmatprep.subr.bf16.mxu0 0
    %78 = vmatpush1.bf16.msra.mxu0 0
    %79 = vmatprep.subr.bf16.mxu0 0
    %80 = vmatpush1.bf16.msra.mxu0 0
    %81 = vmatprep.subr.bf16.mxu0 0
    %82 = vmatpush1.bf16.msra.mxu0 0
    %83 = vmatprep.subr.bf16.mxu0 0
    %84 = vmatpush1.bf16.msra.mxu0 0
    %85 = vmatprep.subr.bf16.mxu0 0
    %86 = vmatpush1.bf16.msra.mxu0 0
    %87 = vmatprep.subr.bf16.mxu0 0
    %88 = vmatpush1.bf16.msra.mxu0 0
    %89 = vmatprep.subr.bf16.mxu0 0
    %90 = vmatpush1.bf16.msra.mxu0 0
    %91 = vmatprep.subr.bf16.mxu0 0
    %92 = vmatpush1.bf16.msra.mxu0 0
    %93 = vmatprep.subr.bf16.mxu0 0
    %94 = vmatpush1.bf16.msra.mxu0 0
    %95 = vmatprep.mubr.bf16.mxu0 0
    %96 = vmatmul.mubr.bf16.gmra.mrb[0].mxu0 %v48
    %v97 = vpop.f32.mrb[0].mxu0
    %v98 = vadd.f32 0.0, %v97
    %v99 = vpop.f32.mrb[0].mxu0
    %v100 = vpop.f32.mrb[0].mxu0
    %v101 = vadd.f32 0.0, %v100
    %v102 = vpop.f32.mrb[0].mxu0
    %103 = vmatprep.mubr.bf16.mxu0 0
    %104 = vmatmul.mubr.bf16.gmra.mrb[0].mxu0 %v51
    %v105 = vpop.f32.mrb[0].mxu0
    %v106 = vadd.f32 0.0, %v105
    %v107 = vpop.f32.mrb[0].mxu0
    %v108 = vpop.f32.mrb[0].mxu0
    %v109 = vadd.f32 0.0, %v108
    %v110 = vpop.f32.mrb[0].mxu0
    %111 = vmatprep.mubr.bf16.mxu0 0
    %112 = vmatmul.mubr.bf16.gmra.mrb[0].mxu0 %v54
    %v113 = vpop.f32.mrb[0].mxu0
    %v114 = vadd.f32 0.0, %v113
    %v115 = vpop.f32.mrb[0].mxu0
    %v116 = vpop.f32.mrb[0].mxu0
    %v117 = vadd.f32 0.0, %v116
    %v118 = vpop.f32.mrb[0].mxu0
    %119 = vmatprep.mubr.bf16.mxu0 0
    %120 = vmatmul.mubr.bf16.gmra.mrb[0].mxu0 %v57
    %v121 = vpop.f32.mrb[0].mxu0
    %v122 = vadd.f32 0.0, %v121
    %v123 = vpop.f32.mrb[0].mxu0
    %v124 = vpop.f32.mrb[0].mxu0
    %v125 = vadd.f32 0.0, %v124
    %v126 = vpop.f32.mrb[0].mxu0
    %127 = vdwg.mxu0
    %v128 = vadd.f32 %v25, %v98
    %v129 = vadd.f32 %v26, %v101
    %v130 = vadd.f32 %v27, %v106
    %v131 = vadd.f32 %v28, %v109
    %v132 = vadd.f32 %v29, %v114
    %v133 = vadd.f32 %v30, %v117
    %v134 = vadd.f32 %v31, %v122
    %v135 = vadd.f32 %v32, %v125
    %136 = vst [vmem:[#allocation2] sm:$0xff] %v128
    %137 = vst [vmem:[#allocation2 + $0x8] sm:$0xff] %v129
    %138 = vst [vmem:[#allocation2 + $0x10] sm:$0xff] %v130
    %139 = vst [vmem:[#allocation2 + $0x18] sm:$0xff] %v131
    %140 = vst [vmem:[#allocation2 + $0x20] sm:$0xff] %v132
    %141 = vst [vmem:[#allocation2 + $0x28] sm:$0xff] %v133
    %142 = vst [vmem:[#allocation2 + $0x30] sm:$0xff] %v134
    %143 = vst [vmem:[#allocation2 + $0x38] sm:$0xff] %v135
    // Predicated region
    $region14: #{tpu_custom_call.1} parent=1 // pred_check
      %p144 = pneg %p13
    $region15: #{tpu_custom_call.1} parent=1 // pred_check_branch
      %146 = sbr.rel (%p144) target = $region17
    $region16: #{tpu_custom_call.1} parent=1 // pred_region
      %v147 = vld [vmem:[#allocation2] sm:$0xff]
      %v148 = vld [vmem:[#allocation2 + $0x8] sm:$0xff]
      %v149 = vld [vmem:[#allocation2 + $0x10] sm:$0xff]
      %v150 = vld [vmem:[#allocation2 + $0x18] sm:$0xff]
      %v151 = vld [vmem:[#allocation2 + $0x20] sm:$0xff]
      %v152 = vld [vmem:[#allocation2 + $0x28] sm:$0xff]
      %v153 = vld [vmem:[#allocation2 + $0x30] sm:$0xff]
      %v154 = vld [vmem:[#allocation2 + $0x38] sm:$0xff]
      %v155 = vpack.c.bf16 %v148, %v147
      %v156 = vpack.c.bf16 %v150, %v149
      %v157 = vpack.c.bf16 %v152, %v151
      %v158 = vpack.c.bf16 %v154, %v153
      %v163 = vunpack.c.l.b16 %v155
      %v164 = vunpack.c.h.b16 %v155
      %v165 = vunpack.c.l.b16 %v156
      %v166 = vunpack.c.h.b16 %v156
      %v167 = vunpack.c.l.b16 %v157
      %v168 = vunpack.c.h.b16 %v157
      %v169 = vunpack.c.l.b16 %v158
      %v170 = vunpack.c.h.b16 %v158
      %v171 = vpack.c.b16 %v163, %v163
      %v172 = vpack.c.b16 %v164, %v164
      %v173 = vpack.c.b16 %v165, %v165
      %v174 = vpack.c.b16 %v166, %v166
      %v175 = vpack.c.b16 %v167, %v167
      %v176 = vpack.c.b16 %v168, %v168
      %v177 = vpack.c.b16 %v169, %v169
      %v178 = vpack.c.b16 %v170, %v170
      %187 = vst [vmem:[#allocation3] sm:$0xf] %v171
      %188 = vst [vmem:[#allocation3 + $0x4] sm:$0xf] %v172
      %189 = vst [vmem:[#allocation3 + $0x8] sm:$0xf] %v173
      %190 = vst [vmem:[#allocation3 + $0xc] sm:$0xf] %v174
      %191 = vst [vmem:[#allocation3 + $0x10] sm:$0xf] %v175
      %192 = vst [vmem:[#allocation3 + $0x14] sm:$0xf] %v176
      %193 = vst [vmem:[#allocation3 + $0x18] sm:$0xf] %v177
      %194 = vst [vmem:[#allocation3 + $0x1c] sm:$0xf] %v178
    $region17: #{tpu_custom_call.1} parent=1 // pred_fallthru
      _
    // Predicated region
    $region18: #{tpu_custom_call.1} parent=1 // pred_check
      _
    $region19: #{tpu_custom_call.1} parent=1 // pred_check_branch
      %196 = sbr.rel (0) target = $region21
    $region20: #{tpu_custom_call.1} parent=1 // pred_region
      %s198 = ssub.s32 512, 512
      %199 = vsyncadd [#allocation4], %s198
      %s200 = sshll.u32 [#allocation3], 4
      %s201 = int_to_ptr.vmem [resolvable:$true] %s200
      %206 = dma.vmem_to_hbm [thread:$0]  %s201, 512, %s2, [#allocation4], 64, 64, 4
    $region21: #{tpu_custom_call.1} parent=1 // pred_fallthru
      _
    // Predicated region
    $region22: #{tpu_custom_call.1} parent=1 // pred_check
      _
    $region23: #{tpu_custom_call.1} parent=1 // pred_check_branch
      %208 = sbr.rel (0) target = $region25
    $region24: #{tpu_custom_call.1} parent=1 // pred_region
      %209 = dma.done [#allocation4], 512
    $region25: #{tpu_custom_call.1} parent=1 // pred_fallthru
      _
    %210 = vsyncpa [#allocation4], 1

</llo_original>
